<compile_context>
chip_gen: v7x
topology: tpu7x:2x2x1
jax: 0.10.0
libtpu: 0.0.40
codegen_flags: <defaults>
</compile_context>

<pallas_src>
import functools

import jax
import jax.numpy as jnp
from jax import lax
from jax.experimental import pallas as pl
from jax.experimental.pallas import tpu as pltpu


def _sepconv_kernel(x_ref, dw_ref, pw_ref, o_ref, *,
                    KH, KW, TH, Wo, stride, dilation, n_row_blocks):
    """One (batch element, output-row block) per grid step.

    x_ref : (1, Hp, Wp, Cin)   padded NHWC input (full image, VMEM-resident)
    dw_ref: (KH, KW, Cin)      depthwise weights
    pw_ref: (Cout, Cin)        pointwise (1x1) weights
    o_ref : (1, Cout, TH*Wo)   lane-dense output row block (NCHW, HW flattened)
    """
    Cin = x_ref.shape[3]

    in_rows = (TH - 1) * stride + (KH - 1) * dilation + 1
    if n_row_blocks == 1:
        xb = x_ref[0]                                       # (Hp, Wp, Cin), static read
    else:
        row0 = pl.program_id(1) * (TH * stride)             # dynamic row-block start
        xb = x_ref[0, pl.ds(row0, in_rows), :, :]           # (in_rows, Wp, Cin)

    dwv = dw_ref[...].astype(jnp.float32)                   # hoisted: single load per step

    # ---- depthwise conv (groups == Cin), f32 accumulate on the VPU ----
    acc = jnp.zeros((TH, Wo, Cin), jnp.float32)
    for kh in range(KH):                                     # static unroll (small kernel)
        for kw in range(KW):
            h0 = kh * dilation
            w0 = kw * dilation
            patch = lax.slice(
                xb,
                (h0, w0, 0),
                (h0 + (TH - 1) * stride + 1, w0 + (Wo - 1) * stride + 1, Cin),
                (stride, stride, 1))                         # (TH, Wo, Cin)
            acc = acc + patch.astype(jnp.float32) * dwv[kh, kw]

    # Collapse leading dims (lane dim Cin unchanged -> layout-preserving).
    acc_flat = acc.reshape(TH * Wo, Cin)                     # (TH*Wo, Cin)

    # ---- pointwise 1x1 conv: (Cout, Cin) . (TH*Wo, Cin)^T on the MXU ----
    pw = pw_ref[...]                                         # (Cout, Cin)
    rhs = acc_flat.astype(jnp.bfloat16) if pw.dtype == jnp.bfloat16 else acc_flat
    y = lax.dot_general(pw, rhs,
                        dimension_numbers=(((1,), (1,)), ((), ())),
                        preferred_element_type=jnp.float32)  # (Cout, TH*Wo)

    o_ref[0] = y.astype(o_ref.dtype)                         # dense, 128-lane-aligned store


def _pick_row_tile(Ho, Wo, min_blocks=2):
    """Largest output-row tile TH with: TH | Ho, (TH*Wo) % 128 == 0 and at least
    `min_blocks` grid steps; falls back to the full height (single block)."""
    for th in (256, 128, 64, 32, 16, 8, 4, 2, 1):
        if th < Ho and Ho % th == 0 and (th * Wo) % 128 == 0 and Ho // th >= min_blocks:
            return th
    return Ho


def separable_conv2d(x_nchw, dw_torch, pw_torch, *,
                     stride=1, padding=0, dilation=1):
    """Forward pass equivalent to SeperableConv2d (bias=False).

    x_nchw   : (N, Cin, H, W)        -- PyTorch NCHW input
    dw_torch : (Cin, 1, KH, KW)      -- depthwise conv weight (torch layout)
    pw_torch : (Cout, Cin, 1, 1)     -- pointwise conv weight (torch layout)
    returns  : (N, Cout, Ho, Wo)     -- NCHW output
    """
    N, Cin, H, W = x_nchw.shape
    KH, KW = int(dw_torch.shape[2]), int(dw_torch.shape[3])
    Cout = int(pw_torch.shape[0])

    Ho = (H + 2 * padding - dilation * (KH - 1) - 1) // stride + 1
    Wo = (W + 2 * padding - dilation * (KW - 1) - 1) // stride + 1

    # Weight layout plumbing (done once, plain JAX):
    #   depthwise (Cin,1,KH,KW) -> (KH,KW,Cin); pointwise (Cout,Cin,1,1) -> (Cout,Cin)
    dw = jnp.transpose(dw_torch[:, 0, :, :], (1, 2, 0))
    pw = pw_torch[:, :, 0, 0]

    # NCHW -> NHWC + spatial zero-pad (input-side layout plumbing).
    x = jnp.transpose(x_nchw, (0, 2, 3, 1))
    x = jnp.pad(x, ((0, 0), (padding, padding), (padding, padding), (0, 0)))
    Hp, Wp = x.shape[1], x.shape[2]

    TH = _pick_row_tile(Ho, Wo)
    HB = Ho // TH

    kernel = functools.partial(
        _sepconv_kernel, KH=KH, KW=KW, TH=TH, Wo=Wo,
        stride=stride, dilation=dilation, n_row_blocks=HB)

    # TODO(synk): for large images the whole padded image no longer fits VMEM
    # (worst on v7x's 64 MiB); switch the input to memory_space=pl.ANY with
    # manual halo DMA per row block instead of a fully-resident input block.
    out_flat = pl.pallas_call(
        kernel,
        out_shape=jax.ShapeDtypeStruct((N, Cout, Ho * Wo), x_nchw.dtype),
        grid=(N, HB),
        in_specs=[
            pl.BlockSpec((1, Hp, Wp, Cin), lambda n, hb: (n, 0, 0, 0)),  # resident per n
            pl.BlockSpec((KH, KW, Cin), lambda n, hb: (0, 0, 0)),
            pl.BlockSpec((Cout, Cin), lambda n, hb: (0, 0)),
        ],
        out_specs=pl.BlockSpec((1, Cout, TH * Wo), lambda n, hb: (n, 0, hb)),
        compiler_params=pltpu.CompilerParams(
            dimension_semantics=("parallel", "parallel"),
            vmem_limit_bytes=32 * 1024 * 1024),  # tiles are KB-scale; 32 MiB is safe on v5e/v6e/v7x
    )(x, dw, pw)

    # (N, Cout, Ho*Wo) is already NCHW with HW flattened -> free metadata reshape.
    return out_flat.reshape(N, Cout, Ho, Wo)


def _reference(x_nchw, dw_torch, pw_torch, *, stride, padding, dilation):
    """Pure-JAX reference using lax.conv_general_dilated (for checking)."""
    Cin = x_nchw.shape[1]
    y = lax.conv_general_dilated(
        x_nchw, dw_torch,
        window_strides=(stride, stride),
        padding=((padding, padding), (padding, padding)),
        rhs_dilation=(dilation, dilation),
        dimension_numbers=("NCHW", "OIHW", "NCHW"),
        feature_group_count=Cin,
        precision=lax.Precision.HIGHEST,
    )
    z = lax.conv_general_dilated(
        y, pw_torch,
        window_strides=(1, 1),
        padding=((0, 0), (0, 0)),
        dimension_numbers=("NCHW", "OIHW", "NCHW"),
        precision=lax.Precision.HIGHEST,
    )
    return z


if __name__ == "__main__":
    # Module config: SeperableConv2d(in_channels=4, out_channels=8,
    #                                kernel_size=3, stride=1, padding=1,
    #                                dilation=1, bias=False)
    N, Cin, H, W = 2, 4, 16, 16
    Cout, K = 8, 3
    stride, padding, dilation = 1, 1, 1

    key = jax.random.PRNGKey(0)
    kx, kdw, kpw = jax.random.split(key, 3)

    x = jax.random.normal(kx, (N, Cin, H, W), dtype=jnp.float32)
    # depthwise weight: (Cin, 1, KH, KW); pointwise weight: (Cout, Cin, 1, 1)
    dw_torch = jax.random.normal(kdw, (Cin, 1, K, K), dtype=jnp.float32) * 0.1
    pw_torch = jax.random.normal(kpw, (Cout, Cin, 1, 1), dtype=jnp.float32) * 0.1

    out = separable_conv2d(x, dw_torch, pw_torch,
                           stride=stride, padding=padding, dilation=dilation)
    out = jax.block_until_ready(out)

    ref = _reference(x, dw_torch, pw_torch,
                     stride=stride, padding=padding, dilation=dilation)
    ref = jax.block_until_ready(ref)

    assert out.shape == (N, Cout, H, W), out.shape
    assert jnp.allclose(out, ref, atol=1e-4, rtol=1e-4), \
        float(jnp.max(jnp.abs(out - ref)))

    print("KERNEL_OK")
</pallas_src>

<mosaic_0001>
module attributes {stable_mosaic.version = 11 : i64} {
  func.func @_sepconv_kernel(%arg0: i32, %arg1: i32, %arg2: memref<1x18x18x4xf32, #tpu.memory_space<vmem>>, %arg3: memref<3x3x4xf32, #tpu.memory_space<vmem>>, %arg4: memref<8x4xf32, #tpu.memory_space<vmem>>, %arg5: memref<1x8x128xf32, #tpu.memory_space<vmem>>) attributes {dimension_semantics = [#tpu.dimension_semantics<parallel>, #tpu.dimension_semantics<parallel>], iteration_bounds = array<i64: 2, 2>, scalar_prefetch = 0 : i64, scratch_operands = 0 : i64, tpu.core_type = #tpu.core_type<tc>, window_params = [{transform_indices = @transform_0, window_bounds = array<i64: 1, 18, 18, 4>}, {pipeline_mode = #tpu.pipeline_mode<synchronous>, transform_indices = @transform_1, window_bounds = array<i64: 3, 3, 4>}, {pipeline_mode = #tpu.pipeline_mode<synchronous>, transform_indices = @transform_2, window_bounds = array<i64: 8, 4>}, {transform_indices = @transform_3, window_bounds = array<i64: 1, 8, 128>}]} {
    %c8_i32 = arith.constant 8 : i32
    %0 = arith.muli %arg1, %c8_i32 : i32
    %c0 = arith.constant 0 : index
    %1 = arith.index_cast %0 : i32 to index
    %c0_0 = arith.constant 0 : index
    %c0_1 = arith.constant 0 : index
    %2 = vector.load %arg2[%c0, %1, %c0_0, %c0_1] : memref<1x18x18x4xf32, #tpu.memory_space<vmem>>, vector<1x10x18x4xf32>
    %3 = vector.shape_cast %2 : vector<1x10x18x4xf32> to vector<10x18x4xf32>
    %c0_2 = arith.constant 0 : index
    %c0_3 = arith.constant 0 : index
    %c0_4 = arith.constant 0 : index
    %4 = vector.load %arg3[%c0_2, %c0_3, %c0_4] : memref<3x3x4xf32, #tpu.memory_space<vmem>>, vector<3x3x4xf32>
    %cst = arith.constant 0.000000e+00 : f32
    %5 = vector.broadcast %cst : f32 to vector<8x16x4xf32>
    %6 = vector.extract_strided_slice %3 {offsets = [0, 0, 0], sizes = [8, 16, 4], strides = [1, 1, 1]} : vector<10x18x4xf32> to vector<8x16x4xf32>
    %7 = vector.extract_strided_slice %4 {offsets = [0, 0, 0], sizes = [1, 1, 4], strides = [1, 1, 1]} : vector<3x3x4xf32> to vector<1x1x4xf32>
    %8 = vector.shape_cast %7 : vector<1x1x4xf32> to vector<4xf32>
    %9 = vector.shape_cast %8 : vector<4xf32> to vector<1x1x4xf32>
    %10 = vector.broadcast %9 : vector<1x1x4xf32> to vector<8x16x4xf32>
    %11 = arith.mulf %6, %10 : vector<8x16x4xf32>
    %12 = arith.addf %5, %11 : vector<8x16x4xf32>
    %13 = vector.extract_strided_slice %3 {offsets = [0, 1, 0], sizes = [8, 16, 4], strides = [1, 1, 1]} : vector<10x18x4xf32> to vector<8x16x4xf32>
    %14 = vector.extract_strided_slice %4 {offsets = [0, 1, 0], sizes = [1, 1, 4], strides = [1, 1, 1]} : vector<3x3x4xf32> to vector<1x1x4xf32>
    %15 = vector.shape_cast %14 : vector<1x1x4xf32> to vector<4xf32>
    %16 = vector.shape_cast %15 : vector<4xf32> to vector<1x1x4xf32>
    %17 = vector.broadcast %16 : vector<1x1x4xf32> to vector<8x16x4xf32>
    %18 = arith.mulf %13, %17 : vector<8x16x4xf32>
    %19 = arith.addf %12, %18 : vector<8x16x4xf32>
    %20 = vector.extract_strided_slice %3 {offsets = [0, 2, 0], sizes = [8, 16, 4], strides = [1, 1, 1]} : vector<10x18x4xf32> to vector<8x16x4xf32>
    %21 = vector.extract_strided_slice %4 {offsets = [0, 2, 0], sizes = [1, 1, 4], strides = [1, 1, 1]} : vector<3x3x4xf32> to vector<1x1x4xf32>
    %22 = vector.shape_cast %21 : vector<1x1x4xf32> to vector<4xf32>
    %23 = vector.shape_cast %22 : vector<4xf32> to vector<1x1x4xf32>
    %24 = vector.broadcast %23 : vector<1x1x4xf32> to vector<8x16x4xf32>
    %25 = arith.mulf %20, %24 : vector<8x16x4xf32>
    %26 = arith.addf %19, %25 : vector<8x16x4xf32>
    %27 = vector.extract_strided_slice %3 {offsets = [1, 0, 0], sizes = [8, 16, 4], strides = [1, 1, 1]} : vector<10x18x4xf32> to vector<8x16x4xf32>
    %28 = vector.extract_strided_slice %4 {offsets = [1, 0, 0], sizes = [1, 1, 4], strides = [1, 1, 1]} : vector<3x3x4xf32> to vector<1x1x4xf32>
    %29 = vector.shape_cast %28 : vector<1x1x4xf32> to vector<4xf32>
    %30 = vector.shape_cast %29 : vector<4xf32> to vector<1x1x4xf32>
    %31 = vector.broadcast %30 : vector<1x1x4xf32> to vector<8x16x4xf32>
    %32 = arith.mulf %27, %31 : vector<8x16x4xf32>
    %33 = arith.addf %26, %32 : vector<8x16x4xf32>
    %34 = vector.extract_strided_slice %3 {offsets = [1, 1, 0], sizes = [8, 16, 4], strides = [1, 1, 1]} : vector<10x18x4xf32> to vector<8x16x4xf32>
    %35 = vector.extract_strided_slice %4 {offsets = [1, 1, 0], sizes = [1, 1, 4], strides = [1, 1, 1]} : vector<3x3x4xf32> to vector<1x1x4xf32>
    %36 = vector.shape_cast %35 : vector<1x1x4xf32> to vector<4xf32>
    %37 = vector.shape_cast %36 : vector<4xf32> to vector<1x1x4xf32>
    %38 = vector.broadcast %37 : vector<1x1x4xf32> to vector<8x16x4xf32>
    %39 = arith.mulf %34, %38 : vector<8x16x4xf32>
    %40 = arith.addf %33, %39 : vector<8x16x4xf32>
    %41 = vector.extract_strided_slice %3 {offsets = [1, 2, 0], sizes = [8, 16, 4], strides = [1, 1, 1]} : vector<10x18x4xf32> to vector<8x16x4xf32>
    %42 = vector.extract_strided_slice %4 {offsets = [1, 2, 0], sizes = [1, 1, 4], strides = [1, 1, 1]} : vector<3x3x4xf32> to vector<1x1x4xf32>
    %43 = vector.shape_cast %42 : vector<1x1x4xf32> to vector<4xf32>
    %44 = vector.shape_cast %43 : vector<4xf32> to vector<1x1x4xf32>
    %45 = vector.broadcast %44 : vector<1x1x4xf32> to vector<8x16x4xf32>
    %46 = arith.mulf %41, %45 : vector<8x16x4xf32>
    %47 = arith.addf %40, %46 : vector<8x16x4xf32>
    %48 = vector.extract_strided_slice %3 {offsets = [2, 0, 0], sizes = [8, 16, 4], strides = [1, 1, 1]} : vector<10x18x4xf32> to vector<8x16x4xf32>
    %49 = vector.extract_strided_slice %4 {offsets = [2, 0, 0], sizes = [1, 1, 4], strides = [1, 1, 1]} : vector<3x3x4xf32> to vector<1x1x4xf32>
    %50 = vector.shape_cast %49 : vector<1x1x4xf32> to vector<4xf32>
    %51 = vector.shape_cast %50 : vector<4xf32> to vector<1x1x4xf32>
    %52 = vector.broadcast %51 : vector<1x1x4xf32> to vector<8x16x4xf32>
    %53 = arith.mulf %48, %52 : vector<8x16x4xf32>
    %54 = arith.addf %47, %53 : vector<8x16x4xf32>
    %55 = vector.extract_strided_slice %3 {offsets = [2, 1, 0], sizes = [8, 16, 4], strides = [1, 1, 1]} : vector<10x18x4xf32> to vector<8x16x4xf32>
    %56 = vector.extract_strided_slice %4 {offsets = [2, 1, 0], sizes = [1, 1, 4], strides = [1, 1, 1]} : vector<3x3x4xf32> to vector<1x1x4xf32>
    %57 = vector.shape_cast %56 : vector<1x1x4xf32> to vector<4xf32>
    %58 = vector.shape_cast %57 : vector<4xf32> to vector<1x1x4xf32>
    %59 = vector.broadcast %58 : vector<1x1x4xf32> to vector<8x16x4xf32>
    %60 = arith.mulf %55, %59 : vector<8x16x4xf32>
    %61 = arith.addf %54, %60 : vector<8x16x4xf32>
    %62 = vector.extract_strided_slice %3 {offsets = [2, 2, 0], sizes = [8, 16, 4], strides = [1, 1, 1]} : vector<10x18x4xf32> to vector<8x16x4xf32>
    %63 = vector.extract_strided_slice %4 {offsets = [2, 2, 0], sizes = [1, 1, 4], strides = [1, 1, 1]} : vector<3x3x4xf32> to vector<1x1x4xf32>
    %64 = vector.shape_cast %63 : vector<1x1x4xf32> to vector<4xf32>
    %65 = vector.shape_cast %64 : vector<4xf32> to vector<1x1x4xf32>
    %66 = vector.broadcast %65 : vector<1x1x4xf32> to vector<8x16x4xf32>
    %67 = arith.mulf %62, %66 : vector<8x16x4xf32>
    %68 = arith.addf %61, %67 : vector<8x16x4xf32>
    %69 = vector.shape_cast %68 : vector<8x16x4xf32> to vector<128x4xf32>
    %c0_5 = arith.constant 0 : index
    %c0_6 = arith.constant 0 : index
    %70 = vector.load %arg4[%c0_5, %c0_6] : memref<8x4xf32, #tpu.memory_space<vmem>>, vector<8x4xf32>
    %cst_7 = arith.constant dense<0.000000e+00> : vector<8x128xf32>
    %71 = tpu.matmul %70, %69, %cst_7 {dimension_numbers = #tpu.dot_dimension_numbers<[1], [1], [0], [0], [0, 0, 1, 0], [], []>} : vector<8x4xf32>, vector<128x4xf32>, vector<8x128xf32> -> vector<8x128xf32>
    %c0_8 = arith.constant 0 : index
    %c0_9 = arith.constant 0 : index
    %c0_10 = arith.constant 0 : index
    %72 = vector.load %arg5[%c0_8, %c0_9, %c0_10] : memref<1x8x128xf32, #tpu.memory_space<vmem>>, vector<1x8x128xf32>
    %73 = vector.shape_cast %72 : vector<1x8x128xf32> to vector<8x128xf32>
    %74 = vector.shape_cast %71 : vector<8x128xf32> to vector<1x8x128xf32>
    tpu.vector_store %arg5[%c0_8, %c0_9, %c0_10], %74 {strides = array<i32>} : memref<1x8x128xf32, #tpu.memory_space<vmem>>, vector<1x8x128xf32>,
    return
  }
  func.func @transform_0(%arg0: i32, %arg1: i32) -> (i32, i32, i32, i32) {
    %c0_i32 = arith.constant 0 : i32
    %c0_i32_0 = arith.constant 0 : i32
    %c0_i32_1 = arith.constant 0 : i32
    %c0_i32_2 = arith.constant 0 : i32
    return %arg0, %c0_i32, %c0_i32_0, %c0_i32_1 : i32, i32, i32, i32
  }
  func.func @transform_1(%arg0: i32, %arg1: i32) -> (i32, i32, i32) {
    %c0_i32 = arith.constant 0 : i32
    %c0_i32_0 = arith.constant 0 : i32
    %c0_i32_1 = arith.constant 0 : i32
    %c0_i32_2 = arith.constant 0 : i32
    return %c0_i32, %c0_i32_0, %c0_i32_1 : i32, i32, i32
  }
  func.func @transform_2(%arg0: i32, %arg1: i32) -> (i32, i32) {
    %c0_i32 = arith.constant 0 : i32
    %c0_i32_0 = arith.constant 0 : i32
    %c0_i32_1 = arith.constant 0 : i32
    return %c0_i32, %c0_i32_0 : i32, i32
  }
  func.func @transform_3(%arg0: i32, %arg1: i32) -> (i32, i32, i32) {
    %c0_i32 = arith.constant 0 : i32
    %c0_i32_0 = arith.constant 0 : i32
    return %arg0, %c0_i32, %arg1 : i32, i32, i32
  }
}

</mosaic_0001>

<llo_original>
// kernel: tpu_custom_call.1
$region0: #{tpu_custom_call.1}
  #allocation0 [shape = 'u32[]', space=smem, size = 0x4, offset = 0x4, fixed_abs, tag = 'smem constant byte address 0x4 - core index']
  #allocation1 [shape = 'u32[144,128]{1,0:T(1,128)}', space=vmem, size = 0x12000, scoped, tag = 'internal scratch']
  %s0 = inlined_call_operand.vmem [shape: f32[2,18,18,4], index: 0, kind: input, shape index: {}]
  %s1 = inlined_call_operand.vmem [shape: f32[3,3,4], index: 1, kind: input, shape index: {}]
  %s2 = inlined_call_operand.vmem [shape: f32[8,4], index: 2, kind: input, shape index: {}]
  %s3 = inlined_call_operand.hbm [shape: f32[2,8,256], index: 3, kind: output, shape index: {}]
  %s4 = sld [smem:[#allocation0]]
  $region45: #{tpu_custom_call.1} parent=0
    _
  %s6 = ssub.s32 1, %s4
  %s7 = scalar_select 0, %s6, %s4
  $region1: #{tpu_custom_call.1} parent=0
    #allocation2 [shape = 'u8[8192]{0}', space=vmem, size = 0x2000, scoped, tag = 'output window, operand 0']
    #allocation3 [shape = 's32[2]{0}', space=sflag, size = 0x8, scoped, tag = 'scoped memory for tpu_custom_call.1']
    %8 = vsyncpa [#allocation3], 0
    %s9 = scalar_lea.sflag [#allocation3], 1
    %10 = vsyncpa %s9, 0
    loop: start=0, step=1, limit=6
    $region2: #{tpu_custom_call.1} parent=1 // loop_pre_header
      _
    $region3: #{tpu_custom_call.1} parent=1 // loop_header
      %s12 = sphi 0, %s16
      %p13 = scmp.ge.s32.totalorder %s12, 6
      %s19 = sphi 0, %s31
      %s20 = sphi 0, %s27
      %s21 = sphi 0, %s19
      %s22 = sphi 0, %s20
      %s23 = sphi 0, %s21
      %s24 = sphi 0, %s22
      %s34 = sphi 0, %s36
      %s37 = sphi 0, %s34
      %s38 = sphi 0, %s37
      %s54 = sphi 0, %s38
      %s58 = sphi 0, %s58
      %s60 = sphi 0, %s58
      %s61 = sphi 0, %s60
      %s75 = sphi 0, %s61
      %s79 = sphi 0, %s79
      %s81 = sphi 0, %s79
      %s82 = sphi 0, %s81
      %s96 = sphi 0, %s82
      %s104 = sphi 0, %s106
      %s107 = sphi 0, %s104
      %s108 = sphi 0, %s107
      %s124 = sphi 0, %s108
    $region4: #{tpu_custom_call.1} parent=1 // loop_header_branch
      %15 = sbr.rel (%p13) target = $region8
    $region5: #{tpu_custom_call.1} parent=1 // loop_body
      %s17 = ssub.s32 %s12, 1
      %s18 = ssub.s32 %s12, 2
      %s25 = sadd.s32 1, %s20
      %p26 = scmp.ge.s32.totalorder %s25, 2
      %s27 = scalar_select %p26, 0, %s25
      %s28 = sadd.s32 1, %s19
      %s29 = scalar_select %p26, %s28, %s19
      %p30 = scmp.ge.s32.totalorder %s29, 2
      %s31 = scalar_select %p30, 0, %s29
      %s32 = ssub.s32 %s19, %s31
      %p33 = scmp.eq.s32.totalorder %s32, 0
      %s35 = sadd.s32 %s34, 1
      %s36 = scalar_select %p33, %s34, %s35
      %p39 = pneg %p33
      %p40 = scmp.eq.s32.totalorder %s12, 3
      %p41 = por %p39, %p40
      %p42 = scmp.ne.s32.totalorder %s34, %s37
      %p43 = scmp.eq.s32.totalorder %s12, 0
      %p44 = por %p42, %p43
      %p45 = scmp.ne.s32.totalorder %s34, %s37
      %p46 = scmp.eq.s32.totalorder %s17, 3
      %p47 = por %p45, %p46
      %p48 = scmp.ne.s32.totalorder %s37, %s38
      %p49 = scmp.eq.s32.totalorder %s17, 0
      %p50 = por %p48, %p49
      %p51 = scmp.ne.s32.totalorder %s37, %s38
      %p52 = scmp.eq.s32.totalorder %s18, 3
      %p53 = por %p51, %p52
      %p55 = scmp.ne.s32.totalorder %s38, %s54
      %p56 = scmp.eq.s32.totalorder %s18, 0
      %p57 = por %p55, %p56
      %s59 = sadd.s32 %s58, 1
      %p62 = scmp.eq.s32.totalorder %s12, 3
      %p63 = scmp.ne.s32.totalorder %s58, %s60
      %p64 = scmp.eq.s32.totalorder %s12, 0
      %p65 = por %p63, %p64
      %p66 = scmp.ne.s32.totalorder %s58, %s60
      %p67 = scmp.eq.s32.totalorder %s17, 3
      %p68 = por %p66, %p67
      %p69 = scmp.ne.s32.totalorder %s60, %s61
      %p70 = scmp.eq.s32.totalorder %s17, 0
      %p71 = por %p69, %p70
      %p72 = scmp.ne.s32.totalorder %s60, %s61
      %p73 = scmp.eq.s32.totalorder %s18, 3
      %p74 = por %p72, %p73
      %p76 = scmp.ne.s32.totalorder %s61, %s75
      %p77 = scmp.eq.s32.totalorder %s18, 0
      %p78 = por %p76, %p77
      %s80 = sadd.s32 %s79, 1
      %p83 = scmp.eq.s32.totalorder %s12, 3
      %p84 = scmp.ne.s32.totalorder %s79, %s81
      %p85 = scmp.eq.s32.totalorder %s12, 0
      %p86 = por %p84, %p85
      %p87 = scmp.ne.s32.totalorder %s79, %s81
      %p88 = scmp.eq.s32.totalorder %s17, 3
      %p89 = por %p87, %p88
      %p90 = scmp.ne.s32.totalorder %s81, %s82
      %p91 = scmp.eq.s32.totalorder %s17, 0
      %p92 = por %p90, %p91
      %p93 = scmp.ne.s32.totalorder %s81, %s82
      %p94 = scmp.eq.s32.totalorder %s18, 3
      %p95 = por %p93, %p94
      %p97 = scmp.ne.s32.totalorder %s82, %s96
      %p98 = scmp.eq.s32.totalorder %s18, 0
      %p99 = por %p97, %p98
      %s100 = ssub.s32 %s19, %s31
      %s101 = ssub.s32 %s20, %s27
      %s102 = sor.u32 %s100, %s101
      %p103 = scmp.eq.s32.totalorder %s102, 0
      %s105 = sadd.s32 %s104, 1
      %s106 = scalar_select %p103, %s104, %s105
      %p109 = pneg %p103
      %p110 = scmp.eq.s32.totalorder %s12, 3
      %p111 = por %p109, %p110
      %p112 = scmp.ne.s32.totalorder %s104, %s107
      %p113 = scmp.eq.s32.totalorder %s12, 0
      %p114 = por %p112, %p113
      %p115 = scmp.ne.s32.totalorder %s104, %s107
      %p116 = scmp.eq.s32.totalorder %s17, 3
      %p117 = por %p115, %p116
      %p118 = scmp.ne.s32.totalorder %s107, %s108
      %p119 = scmp.eq.s32.totalorder %s17, 0
      %p120 = por %p118, %p119
      %p121 = scmp.ne.s32.totalorder %s107, %s108
      %p122 = scmp.eq.s32.totalorder %s18, 3
      %p123 = por %p121, %p122
      %p125 = scmp.ne.s32.totalorder %s108, %s124
      %p126 = scmp.eq.s32.totalorder %s18, 0
      %p127 = por %p125, %p126
      %p128 = scmp.le.s32.totalorder 1, %s12
      %p129 = scmp.lt.s32.totalorder %s12, 5
      %p130 = pnand %p128, %p129
      %p131 = pneg %p130
      // Predicated region
      $region9: #{tpu_custom_call.1} parent=5 // pred_check
        _
      $region10: #{tpu_custom_call.1} parent=5 // pred_check_branch
        %133 = sbr.rel (%p130) target = $region12
      $region11: #{tpu_custom_call.1} parent=5 // pred_region
        %s134 = ssub.s32 %s12, 1
        // Predicated region
        $region13: #{tpu_custom_call.1} parent=11 // pred_check
          %p135 = pneg %p71
        $region14: #{tpu_custom_call.1} parent=11 // pred_check_branch
          %137 = sbr.rel (%p135) target = $region16
        $region15: #{tpu_custom_call.1} parent=11 // pred_region
          _
        $region16: #{tpu_custom_call.1} parent=11 // pred_fallthru
          _
        // Predicated region
        $region17: #{tpu_custom_call.1} parent=11 // pred_check
          %p138 = pneg %p92
        $region18: #{tpu_custom_call.1} parent=11 // pred_check_branch
          %140 = sbr.rel (%p138) target = $region20
        $region19: #{tpu_custom_call.1} parent=11 // pred_region
          _
        $region20: #{tpu_custom_call.1} parent=11 // pred_fallthru
          _
      $region12: #{tpu_custom_call.1} parent=5 // pred_fallthru
        _
      %p141 = scmp.lt.s32.totalorder %s12, 4
      // Predicated region
      $region21: #{tpu_custom_call.1} parent=5 // pred_check
        %p142 = pneg %p141
      $region22: #{tpu_custom_call.1} parent=5 // pred_check_branch
        %144 = sbr.rel (%p142) target = $region24
      $region23: #{tpu_custom_call.1} parent=5 // pred_region
        // Predicated region
        $region25: #{tpu_custom_call.1} parent=23 // pred_check
          %p145 = pneg %p44
        $region26: #{tpu_custom_call.1} parent=23 // pred_check_branch
          %147 = sbr.rel (%p145) target = $region28
        $region27: #{tpu_custom_call.1} parent=23 // pred_region
          %p148 = scmp.lt.s32.totalorder %s19, 1
          %s149 = scalar_select %p148, %s19, 1
          %s150 = smul.addr %s149, 54
          %s151 = smul.addr %s150, 8
          %s152 = scalar_lea.vmem %s0, %s151
        $region28: #{tpu_custom_call.1} parent=23 // pred_fallthru
          _
      $region24: #{tpu_custom_call.1} parent=5 // pred_fallthru
        _
      %p153 = scmp.le.s32.totalorder 1, %s12
      %p154 = scmp.lt.s32.totalorder %s12, 5
      %p155 = pnand %p153, %p154
      %p156 = pneg %p155
      // Predicated region
      $region29: #{tpu_custom_call.1} parent=5 // pred_check
        _
      $region30: #{tpu_custom_call.1} parent=5 // pred_check_branch
        %158 = sbr.rel (%p155) target = $region32
      $region31: #{tpu_custom_call.1} parent=5 // pred_region
        %s159 = ssub.s32 %s12, 1
        %p160 = scmp.lt.s32.totalorder %s21, 1
        %s161 = scalar_select %p160, %s21, 1
        %s162 = smul.addr %s161, 54
        %s163 = smul.addr %s162, 8
        %s164 = scalar_lea.vmem %s0, %s163
        %p165 = pneg %p50
        %p166 = pneg %p47
        %p167 = pneg %p71
        %p168 = pneg %p68
        %p169 = pneg %p92
        %p170 = pneg %p89
        %p171 = pneg %p120
        %p172 = pneg %p117
        %s173 = sand.u32 %s107, 1
        %s174 = scalar_lea.sflag [#allocation3], %s173
        %s175 = sand.u32 %s107, 1
        %s176 = smul.addr %s175, 8
        %s177 = scalar_lea.vmem [#allocation2], %s176
        %p178 = scmp.lt.s32.totalorder %s21, 1
        %s179 = scalar_select %p178, %s21, 1
        %s180 = smul.addr %s179, 54
        %s181 = smul.addr %s180, 8
        %s182 = scalar_lea.vmem %s0, %s181
        %s183 = smul.u32 %s22, 8
        %s184 = smul.u32 %s183, 24
        %s185 = scalar_lea.vmem %s182, %s184
        %v186 = vld [vmem:[%s185] sm:$0xff]
        %v187 = vld [vmem:[%s185 + $0x8] sm:$0xff]
        %v188 = vld [vmem:[%s185 + $0x10] sm:$0x3]
        %v189 = vld [vmem:[%s185 + $0x18] sm:$0xff]
        %v190 = vld [vmem:[%s185 + $0x20] sm:$0xff]
        %v191 = vld [vmem:[%s185 + $0x28] sm:$0x3]
        %v192 = vld [vmem:[%s185 + $0x30] sm:$0xff]
        %v193 = vld [vmem:[%s185 + $0x38] sm:$0xff]
        %v194 = vld [vmem:[%s185 + $0x40] sm:$0x3]
        %v195 = vld [vmem:[%s185 + $0x48] sm:$0xff]
        %v196 = vld [vmem:[%s185 + $0x50] sm:$0xff]
        %v197 = vld [vmem:[%s185 + $0x58] sm:$0x3]
        %v198 = vld [vmem:[%s185 + $0x60] sm:$0xff]
        %v199 = vld [vmem:[%s185 + $0x68] sm:$0xff]
        %v200 = vld [vmem:[%s185 + $0x70] sm:$0x3]
        %v201 = vld [vmem:[%s185 + $0x78] sm:$0xff]
        %v202 = vld [vmem:[%s185 + $0x80] sm:$0xff]
        %v203 = vld [vmem:[%s185 + $0x88] sm:$0x3]
        %v204 = vld [vmem:[%s185 + $0x90] sm:$0xff]
        %v205 = vld [vmem:[%s185 + $0x98] sm:$0xff]
        %v206 = vld [vmem:[%s185 + $0xa0] sm:$0x3]
        %v207 = vld [vmem:[%s185 + $0xa8] sm:$0xff]
        %v208 = vld [vmem:[%s185 + $0xb0] sm:$0xff]
        %v209 = vld [vmem:[%s185 + $0xb8] sm:$0x3]
        %v210 = vld [vmem:[%s185 + $0xc0] sm:$0xff]
        %v211 = vld [vmem:[%s185 + $0xc8] sm:$0xff]
        %v212 = vld [vmem:[%s185 + $0xd0] sm:$0x3]
        %v213 = vld [vmem:[%s185 + $0xd8] sm:$0xff]
        %v214 = vld [vmem:[%s185 + $0xe0] sm:$0xff]
        %v215 = vld [vmem:[%s185 + $0xe8] sm:$0x3]
        %v216 = vld [vmem:[%s1] sm:$0x7]
        %v217 = vld [vmem:[%s1 + $0x4] sm:$0x7]
        %v218 = vld [vmem:[%s1 + $0x8] sm:$0x7]
        %v219 = vlaneseq
        %v220 = vshrl.u32 %v219, 7
        %v221 = vsub.s32 0, %v220
        %v222 = vrot.slane %v216, %v221
        %v223 = vmul.f32 %v186, %v222
        %v224 = vmul.f32 %v187, %v222
        %v225 = vmul.f32 %v189, %v222
        %v226 = vmul.f32 %v190, %v222
        %v227 = vmul.f32 %v192, %v222
        %v228 = vmul.f32 %v193, %v222
        %v229 = vmul.f32 %v195, %v222
        %v230 = vmul.f32 %v196, %v222
        %v231 = vmul.f32 %v198, %v222
        %v232 = vmul.f32 %v199, %v222
        %v233 = vmul.f32 %v201, %v222
        %v234 = vmul.f32 %v202, %v222
        %v235 = vmul.f32 %v204, %v222
        %v236 = vmul.f32 %v205, %v222
        %v237 = vmul.f32 %v207, %v222
        %v238 = vmul.f32 %v208, %v222
        %v239 = vadd.f32 %v223, 0.0
        %v240 = vadd.f32 %v224, 0.0
        %v241 = vadd.f32 %v225, 0.0
        %v242 = vadd.f32 %v226, 0.0
        %v243 = vadd.f32 %v227, 0.0
        %v244 = vadd.f32 %v228, 0.0
        %v245 = vadd.f32 %v229, 0.0
        %v246 = vadd.f32 %v230, 0.0
        %v247 = vadd.f32 %v231, 0.0
        %v248 = vadd.f32 %v232, 0.0
        %v249 = vadd.f32 %v233, 0.0
        %v250 = vadd.f32 %v234, 0.0
        %v251 = vadd.f32 %v235, 0.0
        %v252 = vadd.f32 %v236, 0.0
        %v253 = vadd.f32 %v237, 0.0
        %v254 = vadd.f32 %v238, 0.0
        %v255 = vlaneseq
        %v256 = vshrl.u32 %v255, 7
        %v257 = vsub.s32 1, %v256
        %v258 = vrot.slane %v216, %v257
        %v259 = vmul.f32 %v186, %v258
        %v260 = vmul.f32 %v187, %v258
        %v261 = vmul.f32 %v188, %v258
        %v262 = vmul.f32 %v189, %v258
        %v263 = vmul.f32 %v190, %v258
        %v264 = vmul.f32 %v191, %v258
        %v265 = vmul.f32 %v192, %v258
        %v266 = vmul.f32 %v193, %v258
        %v267 = vmul.f32 %v194, %v258
        %v268 = vmul.f32 %v195, %v258
        %v269 = vmul.f32 %v196, %v258
        %v270 = vmul.f32 %v197, %v258
        %v271 = vmul.f32 %v198, %v258
        %v272 = vmul.f32 %v199, %v258
        %v273 = vmul.f32 %v200, %v258
        %v274 = vmul.f32 %v201, %v258
        %v275 = vmul.f32 %v202, %v258
        %v276 = vmul.f32 %v203, %v258
        %v277 = vmul.f32 %v204, %v258
        %v278 = vmul.f32 %v205, %v258
        %v279 = vmul.f32 %v206, %v258
        %v280 = vmul.f32 %v207, %v258
        %v281 = vmul.f32 %v208, %v258
        %v282 = vmul.f32 %v209, %v258
        %vm307 = vcmask 1046528
        %v308 = vrot.slane %v259, 1
        %v309 = vrot.slane %v260, 1
        %v310 = vsel %vm307, %v308, %v309
        %v311 = vrot.slane %v261, 1
        %v312 = vsel %vm307, %v309, %v311
        %v313 = vrot.slane %v262, 1
        %v314 = vrot.slane %v263, 1
        %v315 = vsel %vm307, %v313, %v314
        %v316 = vrot.slane %v264, 1
        %v317 = vsel %vm307, %v314, %v316
        %v318 = vrot.slane %v265, 1
        %v319 = vrot.slane %v266, 1
        %v320 = vsel %vm307, %v318, %v319
        %v321 = vrot.slane %v267, 1
        %v322 = vsel %vm307, %v319, %v321
        %v323 = vrot.slane %v268, 1
        %v324 = vrot.slane %v269, 1
        %v325 = vsel %vm307, %v323, %v324
        %v326 = vrot.slane %v270, 1
        %v327 = vsel %vm307, %v324, %v326
        %v328 = vrot.slane %v271, 1
        %v329 = vrot.slane %v272, 1
        %v330 = vsel %vm307, %v328, %v329
        %v331 = vrot.slane %v273, 1
        %v332 = vsel %vm307, %v329, %v331
        %v333 = vrot.slane %v274, 1
        %v334 = vrot.slane %v275, 1
        %v335 = vsel %vm307, %v333, %v334
        %v336 = vrot.slane %v276, 1
        %v337 = vsel %vm307, %v334, %v336
        %v338 = vrot.slane %v277, 1
        %v339 = vrot.slane %v278, 1
        %v340 = vsel %vm307, %v338, %v339
        %v341 = vrot.slane %v279, 1
        %v342 = vsel %vm307, %v339, %v341
        %v343 = vrot.slane %v280, 1
        %v344 = vrot.slane %v281, 1
        %v345 = vsel %vm307, %v343, %v344
        %v346 = vrot.slane %v282, 1
        %v347 = vsel %vm307, %v344, %v346
        %v364 = vadd.f32 %v239, %v310
        %v365 = vadd.f32 %v240, %v312
        %v366 = vadd.f32 %v241, %v315
        %v367 = vadd.f32 %v242, %v317
        %v368 = vadd.f32 %v243, %v320
        %v369 = vadd.f32 %v244, %v322
        %v370 = vadd.f32 %v245, %v325
        %v371 = vadd.f32 %v246, %v327
        %v372 = vadd.f32 %v247, %v330
        %v373 = vadd.f32 %v248, %v332
        %v374 = vadd.f32 %v249, %v335
        %v375 = vadd.f32 %v250, %v337
        %v376 = vadd.f32 %v251, %v340
        %v377 = vadd.f32 %v252, %v342
        %v378 = vadd.f32 %v253, %v345
        %v379 = vadd.f32 %v254, %v347
        %v380 = vlaneseq
        %v381 = vshrl.u32 %v380, 7
        %v382 = vsub.s32 2, %v381
        %v383 = vrot.slane %v216, %v382
        %v384 = vmul.f32 %v186, %v383
        %v385 = vmul.f32 %v187, %v383
        %v386 = vmul.f32 %v188, %v383
        %v387 = vmul.f32 %v189, %v383
        %v388 = vmul.f32 %v190, %v383
        %v389 = vmul.f32 %v191, %v383
        %v390 = vmul.f32 %v192, %v383
        %v391 = vmul.f32 %v193, %v383
        %v392 = vmul.f32 %v194, %v383
        %v393 = vmul.f32 %v195, %v383
        %v394 = vmul.f32 %v196, %v383
        %v395 = vmul.f32 %v197, %v383
        %v396 = vmul.f32 %v198, %v383
        %v397 = vmul.f32 %v199, %v383
        %v398 = vmul.f32 %v200, %v383
        %v399 = vmul.f32 %v201, %v383
        %v400 = vmul.f32 %v202, %v383
        %v401 = vmul.f32 %v203, %v383
        %v402 = vmul.f32 %v204, %v383
        %v403 = vmul.f32 %v205, %v383
        %v404 = vmul.f32 %v206, %v383
        %v405 = vmul.f32 %v207, %v383
        %v406 = vmul.f32 %v208, %v383
        %v407 = vmul.f32 %v209, %v383
        %vm432 = vcmask 1045504
        %v433 = vrot.slane %v384, 2
        %v434 = vrot.slane %v385, 2
        %v435 = vsel %vm432, %v433, %v434
        %v436 = vrot.slane %v386, 2
        %v437 = vsel %vm432, %v434, %v436
        %v438 = vrot.slane %v387, 2
        %v439 = vrot.slane %v388, 2
        %v440 = vsel %vm432, %v438, %v439
        %v441 = vrot.slane %v389, 2
        %v442 = vsel %vm432, %v439, %v441
        %v443 = vrot.slane %v390, 2
        %v444 = vrot.slane %v391, 2
        %v445 = vsel %vm432, %v443, %v444
        %v446 = vrot.slane %v392, 2
        %v447 = vsel %vm432, %v444, %v446
        %v448 = vrot.slane %v393, 2
        %v449 = vrot.slane %v394, 2
        %v450 = vsel %vm432, %v448, %v449
        %v451 = vrot.slane %v395, 2
        %v452 = vsel %vm432, %v449, %v451
        %v453 = vrot.slane %v396, 2
        %v454 = vrot.slane %v397, 2
        %v455 = vsel %vm432, %v453, %v454
        %v456 = vrot.slane %v398, 2
        %v457 = vsel %vm432, %v454, %v456
        %v458 = vrot.slane %v399, 2
        %v459 = vrot.slane %v400, 2
        %v460 = vsel %vm432, %v458, %v459
        %v461 = vrot.slane %v401, 2
        %v462 = vsel %vm432, %v459, %v461
        %v463 = vrot.slane %v402, 2
        %v464 = vrot.slane %v403, 2
        %v465 = vsel %vm432, %v463, %v464
        %v466 = vrot.slane %v404, 2
        %v467 = vsel %vm432, %v464, %v466
        %v468 = vrot.slane %v405, 2
        %v469 = vrot.slane %v406, 2
        %v470 = vsel %vm432, %v468, %v469
        %v471 = vrot.slane %v407, 2
        %v472 = vsel %vm432, %v469, %v471
        %v489 = vadd.f32 %v364, %v435
        %v490 = vadd.f32 %v365, %v437
        %v491 = vadd.f32 %v366, %v440
        %v492 = vadd.f32 %v367, %v442
        %v493 = vadd.f32 %v368, %v445
        %v494 = vadd.f32 %v369, %v447
        %v495 = vadd.f32 %v370, %v450
        %v496 = vadd.f32 %v371, %v452
        %v497 = vadd.f32 %v372, %v455
        %v498 = vadd.f32 %v373, %v457
        %v499 = vadd.f32 %v374, %v460
        %v500 = vadd.f32 %v375, %v462
        %v501 = vadd.f32 %v376, %v465
        %v502 = vadd.f32 %v377, %v467
        %v503 = vadd.f32 %v378, %v470
        %v504 = vadd.f32 %v379, %v472
        %v505 = vlaneseq
        %v506 = vshrl.u32 %v505, 7
        %v507 = vsub.s32 0, %v506
        %v508 = vrot.slane %v217, %v507
        %v509 = vmul.f32 %v189, %v508
        %v510 = vmul.f32 %v190, %v508
        %v511 = vmul.f32 %v192, %v508
        %v512 = vmul.f32 %v193, %v508
        %v513 = vmul.f32 %v195, %v508
        %v514 = vmul.f32 %v196, %v508
        %v515 = vmul.f32 %v198, %v508
        %v516 = vmul.f32 %v199, %v508
        %v517 = vmul.f32 %v201, %v508
        %v518 = vmul.f32 %v202, %v508
        %v519 = vmul.f32 %v204, %v508
        %v520 = vmul.f32 %v205, %v508
        %v521 = vmul.f32 %v207, %v508
        %v522 = vmul.f32 %v208, %v508
        %v523 = vmul.f32 %v210, %v508
        %v524 = vmul.f32 %v211, %v508
        %v525 = vadd.f32 %v489, %v509
        %v526 = vadd.f32 %v490, %v510
        %v527 = vadd.f32 %v491, %v511
        %v528 = vadd.f32 %v492, %v512
        %v529 = vadd.f32 %v493, %v513
        %v530 = vadd.f32 %v494, %v514
        %v531 = vadd.f32 %v495, %v515
        %v532 = vadd.f32 %v496, %v516
        %v533 = vadd.f32 %v497, %v517
        %v534 = vadd.f32 %v498, %v518
        %v535 = vadd.f32 %v499, %v519
        %v536 = vadd.f32 %v500, %v520
        %v537 = vadd.f32 %v501, %v521
        %v538 = vadd.f32 %v502, %v522
        %v539 = vadd.f32 %v503, %v523
        %v540 = vadd.f32 %v504, %v524
        %v541 = vlaneseq
        %v542 = vshrl.u32 %v541, 7
        %v543 = vsub.s32 1, %v542
        %v544 = vrot.slane %v217, %v543
        %v545 = vmul.f32 %v189, %v544
        %v546 = vmul.f32 %v190, %v544
        %v547 = vmul.f32 %v191, %v544
        %v548 = vmul.f32 %v192, %v544
        %v549 = vmul.f32 %v193, %v544
        %v550 = vmul.f32 %v194, %v544
        %v551 = vmul.f32 %v195, %v544
        %v552 = vmul.f32 %v196, %v544
        %v553 = vmul.f32 %v197, %v544
        %v554 = vmul.f32 %v198, %v544
        %v555 = vmul.f32 %v199, %v544
        %v556 = vmul.f32 %v200, %v544
        %v557 = vmul.f32 %v201, %v544
        %v558 = vmul.f32 %v202, %v544
        %v559 = vmul.f32 %v203, %v544
        %v560 = vmul.f32 %v204, %v544
        %v561 = vmul.f32 %v205, %v544
        %v562 = vmul.f32 %v206, %v544
        %v563 = vmul.f32 %v207, %v544
        %v564 = vmul.f32 %v208, %v544
        %v565 = vmul.f32 %v209, %v544
        %v566 = vmul.f32 %v210, %v544
        %v567 = vmul.f32 %v211, %v544
        %v568 = vmul.f32 %v212, %v544
        %v593 = vrot.slane %v545, 1
        %v594 = vrot.slane %v546, 1
        %v595 = vsel %vm307, %v593, %v594
        %v596 = vrot.slane %v547, 1
        %v597 = vsel %vm307, %v594, %v596
        %v598 = vrot.slane %v548, 1
        %v599 = vrot.slane %v549, 1
        %v600 = vsel %vm307, %v598, %v599
        %v601 = vrot.slane %v550, 1
        %v602 = vsel %vm307, %v599, %v601
        %v603 = vrot.slane %v551, 1
        %v604 = vrot.slane %v552, 1
        %v605 = vsel %vm307, %v603, %v604
        %v606 = vrot.slane %v553, 1
        %v607 = vsel %vm307, %v604, %v606
        %v608 = vrot.slane %v554, 1
        %v609 = vrot.slane %v555, 1
        %v610 = vsel %vm307, %v608, %v609
        %v611 = vrot.slane %v556, 1
        %v612 = vsel %vm307, %v609, %v611
        %v613 = vrot.slane %v557, 1
        %v614 = vrot.slane %v558, 1
        %v615 = vsel %vm307, %v613, %v614
        %v616 = vrot.slane %v559, 1
        %v617 = vsel %vm307, %v614, %v616
        %v618 = vrot.slane %v560, 1
        %v619 = vrot.slane %v561, 1
        %v620 = vsel %vm307, %v618, %v619
        %v621 = vrot.slane %v562, 1
        %v622 = vsel %vm307, %v619, %v621
        %v623 = vrot.slane %v563, 1
        %v624 = vrot.slane %v564, 1
        %v625 = vsel %vm307, %v623, %v624
        %v626 = vrot.slane %v565, 1
        %v627 = vsel %vm307, %v624, %v626
        %v628 = vrot.slane %v566, 1
        %v629 = vrot.slane %v567, 1
        %v630 = vsel %vm307, %v628, %v629
        %v631 = vrot.slane %v568, 1
        %v632 = vsel %vm307, %v629, %v631
        %v649 = vadd.f32 %v525, %v595
        %v650 = vadd.f32 %v526, %v597
        %v651 = vadd.f32 %v527, %v600
        %v652 = vadd.f32 %v528, %v602
        %v653 = vadd.f32 %v529, %v605
        %v654 = vadd.f32 %v530, %v607
        %v655 = vadd.f32 %v531, %v610
        %v656 = vadd.f32 %v532, %v612
        %v657 = vadd.f32 %v533, %v615
        %v658 = vadd.f32 %v534, %v617
        %v659 = vadd.f32 %v535, %v620
        %v660 = vadd.f32 %v536, %v622
        %v661 = vadd.f32 %v537, %v625
        %v662 = vadd.f32 %v538, %v627
        %v663 = vadd.f32 %v539, %v630
        %v664 = vadd.f32 %v540, %v632
        %v665 = vlaneseq
        %v666 = vshrl.u32 %v665, 7
        %v667 = vsub.s32 2, %v666
        %v668 = vrot.slane %v217, %v667
        %v669 = vmul.f32 %v189, %v668
        %v670 = vmul.f32 %v190, %v668
        %v671 = vmul.f32 %v191, %v668
        %v672 = vmul.f32 %v192, %v668
        %v673 = vmul.f32 %v193, %v668
        %v674 = vmul.f32 %v194, %v668
        %v675 = vmul.f32 %v195, %v668
        %v676 = vmul.f32 %v196, %v668
        %v677 = vmul.f32 %v197, %v668
        %v678 = vmul.f32 %v198, %v668
        %v679 = vmul.f32 %v199, %v668
        %v680 = vmul.f32 %v200, %v668
        %v681 = vmul.f32 %v201, %v668
        %v682 = vmul.f32 %v202, %v668
        %v683 = vmul.f32 %v203, %v668
        %v684 = vmul.f32 %v204, %v668
        %v685 = vmul.f32 %v205, %v668
        %v686 = vmul.f32 %v206, %v668
        %v687 = vmul.f32 %v207, %v668
        %v688 = vmul.f32 %v208, %v668
        %v689 = vmul.f32 %v209, %v668
        %v690 = vmul.f32 %v210, %v668
        %v691 = vmul.f32 %v211, %v668
        %v692 = vmul.f32 %v212, %v668
        %v717 = vrot.slane %v669, 2
        %v718 = vrot.slane %v670, 2
        %v719 = vsel %vm432, %v717, %v718
        %v720 = vrot.slane %v671, 2
        %v721 = vsel %vm432, %v718, %v720
        %v722 = vrot.slane %v672, 2
        %v723 = vrot.slane %v673, 2
        %v724 = vsel %vm432, %v722, %v723
        %v725 = vrot.slane %v674, 2
        %v726 = vsel %vm432, %v723, %v725
        %v727 = vrot.slane %v675, 2
        %v728 = vrot.slane %v676, 2
        %v729 = vsel %vm432, %v727, %v728
        %v730 = vrot.slane %v677, 2
        %v731 = vsel %vm432, %v728, %v730
        %v732 = vrot.slane %v678, 2
        %v733 = vrot.slane %v679, 2
        %v734 = vsel %vm432, %v732, %v733
        %v735 = vrot.slane %v680, 2
        %v736 = vsel %vm432, %v733, %v735
        %v737 = vrot.slane %v681, 2
        %v738 = vrot.slane %v682, 2
        %v739 = vsel %vm432, %v737, %v738
        %v740 = vrot.slane %v683, 2
        %v741 = vsel %vm432, %v738, %v740
        %v742 = vrot.slane %v684, 2
        %v743 = vrot.slane %v685, 2
        %v744 = vsel %vm432, %v742, %v743
        %v745 = vrot.slane %v686, 2
        %v746 = vsel %vm432, %v743, %v745
        %v747 = vrot.slane %v687, 2
        %v748 = vrot.slane %v688, 2
        %v749 = vsel %vm432, %v747, %v748
        %v750 = vrot.slane %v689, 2
        %v751 = vsel %vm432, %v748, %v750
        %v752 = vrot.slane %v690, 2
        %v753 = vrot.slane %v691, 2
        %v754 = vsel %vm432, %v752, %v753
        %v755 = vrot.slane %v692, 2
        %v756 = vsel %vm432, %v753, %v755
        %v773 = vadd.f32 %v649, %v719
        %v774 = vadd.f32 %v650, %v721
        %v775 = vadd.f32 %v651, %v724
        %v776 = vadd.f32 %v652, %v726
        %v777 = vadd.f32 %v653, %v729
        %v778 = vadd.f32 %v654, %v731
        %v779 = vadd.f32 %v655, %v734
        %v780 = vadd.f32 %v656, %v736
        %v781 = vadd.f32 %v657, %v739
        %v782 = vadd.f32 %v658, %v741
        %v783 = vadd.f32 %v659, %v744
        %v784 = vadd.f32 %v660, %v746
        %v785 = vadd.f32 %v661, %v749
        %v786 = vadd.f32 %v662, %v751
        %v787 = vadd.f32 %v663, %v754
        %v788 = vadd.f32 %v664, %v756
        %v789 = vlaneseq
        %v790 = vshrl.u32 %v789, 7
        %v791 = vsub.s32 0, %v790
        %v792 = vrot.slane %v218, %v791
        %v793 = vmul.f32 %v192, %v792
        %v794 = vmul.f32 %v193, %v792
        %v795 = vmul.f32 %v195, %v792
        %v796 = vmul.f32 %v196, %v792
        %v797 = vmul.f32 %v198, %v792
        %v798 = vmul.f32 %v199, %v792
        %v799 = vmul.f32 %v201, %v792
        %v800 = vmul.f32 %v202, %v792
        %v801 = vmul.f32 %v204, %v792
        %v802 = vmul.f32 %v205, %v792
        %v803 = vmul.f32 %v207, %v792
        %v804 = vmul.f32 %v208, %v792
        %v805 = vmul.f32 %v210, %v792
        %v806 = vmul.f32 %v211, %v792
        %v807 = vmul.f32 %v213, %v792
        %v808 = vmul.f32 %v214, %v792
        %v809 = vadd.f32 %v773, %v793
        %v810 = vadd.f32 %v774, %v794
        %v811 = vadd.f32 %v775, %v795
        %v812 = vadd.f32 %v776, %v796
        %v813 = vadd.f32 %v777, %v797
        %v814 = vadd.f32 %v778, %v798
        %v815 = vadd.f32 %v779, %v799
        %v816 = vadd.f32 %v780, %v800
        %v817 = vadd.f32 %v781, %v801
        %v818 = vadd.f32 %v782, %v802
        %v819 = vadd.f32 %v783, %v803
        %v820 = vadd.f32 %v784, %v804
        %v821 = vadd.f32 %v785, %v805
        %v822 = vadd.f32 %v786, %v806
        %v823 = vadd.f32 %v787, %v807
        %v824 = vadd.f32 %v788, %v808
        %v825 = vlaneseq
        %v826 = vshrl.u32 %v825, 7
        %v827 = vsub.s32 1, %v826
        %v828 = vrot.slane %v218, %v827
        %v829 = vmul.f32 %v192, %v828
        %v830 = vmul.f32 %v193, %v828
        %v831 = vmul.f32 %v194, %v828
        %v832 = vmul.f32 %v195, %v828
        %v833 = vmul.f32 %v196, %v828
        %v834 = vmul.f32 %v197, %v828
        %v835 = vmul.f32 %v198, %v828
        %v836 = vmul.f32 %v199, %v828
        %v837 = vmul.f32 %v200, %v828
        %v838 = vmul.f32 %v201, %v828
        %v839 = vmul.f32 %v202, %v828
        %v840 = vmul.f32 %v203, %v828
        %v841 = vmul.f32 %v204, %v828
        %v842 = vmul.f32 %v205, %v828
        %v843 = vmul.f32 %v206, %v828
        %v844 = vmul.f32 %v207, %v828
        %v845 = vmul.f32 %v208, %v828
        %v846 = vmul.f32 %v209, %v828
        %v847 = vmul.f32 %v210, %v828
        %v848 = vmul.f32 %v211, %v828
        %v849 = vmul.f32 %v212, %v828
        %v850 = vmul.f32 %v213, %v828
        %v851 = vmul.f32 %v214, %v828
        %v852 = vmul.f32 %v215, %v828
        %v877 = vrot.slane %v829, 1
        %v878 = vrot.slane %v830, 1
        %v879 = vsel %vm307, %v877, %v878
        %v880 = vrot.slane %v831, 1
        %v881 = vsel %vm307, %v878, %v880
        %v882 = vrot.slane %v832, 1
        %v883 = vrot.slane %v833, 1
        %v884 = vsel %vm307, %v882, %v883
        %v885 = vrot.slane %v834, 1
        %v886 = vsel %vm307, %v883, %v885
        %v887 = vrot.slane %v835, 1
        %v888 = vrot.slane %v836, 1
        %v889 = vsel %vm307, %v887, %v888
        %v890 = vrot.slane %v837, 1
        %v891 = vsel %vm307, %v888, %v890
        %v892 = vrot.slane %v838, 1
        %v893 = vrot.slane %v839, 1
        %v894 = vsel %vm307, %v892, %v893
        %v895 = vrot.slane %v840, 1
        %v896 = vsel %vm307, %v893, %v895
        %v897 = vrot.slane %v841, 1
        %v898 = vrot.slane %v842, 1
        %v899 = vsel %vm307, %v897, %v898
        %v900 = vrot.slane %v843, 1
        %v901 = vsel %vm307, %v898, %v900
        %v902 = vrot.slane %v844, 1
        %v903 = vrot.slane %v845, 1
        %v904 = vsel %vm307, %v902, %v903
        %v905 = vrot.slane %v846, 1
        %v906 = vsel %vm307, %v903, %v905
        %v907 = vrot.slane %v847, 1
        %v908 = vrot.slane %v848, 1
        %v909 = vsel %vm307, %v907, %v908
        %v910 = vrot.slane %v849, 1
        %v911 = vsel %vm307, %v908, %v910
        %v912 = vrot.slane %v850, 1
        %v913 = vrot.slane %v851, 1
        %v914 = vsel %vm307, %v912, %v913
        %v915 = vrot.slane %v852, 1
        %v916 = vsel %vm307, %v913, %v915
        %v933 = vadd.f32 %v809, %v879
        %v934 = vadd.f32 %v810, %v881
        %v935 = vadd.f32 %v811, %v884
        %v936 = vadd.f32 %v812, %v886
        %v937 = vadd.f32 %v813, %v889
        %v938 = vadd.f32 %v814, %v891
        %v939 = vadd.f32 %v815, %v894
        %v940 = vadd.f32 %v816, %v896
        %v941 = vadd.f32 %v817, %v899
        %v942 = vadd.f32 %v818, %v901
        %v943 = vadd.f32 %v819, %v904
        %v944 = vadd.f32 %v820, %v906
        %v945 = vadd.f32 %v821, %v909
        %v946 = vadd.f32 %v822, %v911
        %v947 = vadd.f32 %v823, %v914
        %v948 = vadd.f32 %v824, %v916
        %v949 = vlaneseq
        %v950 = vshrl.u32 %v949, 7
        %v951 = vsub.s32 2, %v950
        %v952 = vrot.slane %v218, %v951
        %v953 = vmul.f32 %v192, %v952
        %v954 = vmul.f32 %v193, %v952
        %v955 = vmul.f32 %v194, %v952
        %v956 = vmul.f32 %v195, %v952
        %v957 = vmul.f32 %v196, %v952
        %v958 = vmul.f32 %v197, %v952
        %v959 = vmul.f32 %v198, %v952
        %v960 = vmul.f32 %v199, %v952
        %v961 = vmul.f32 %v200, %v952
        %v962 = vmul.f32 %v201, %v952
        %v963 = vmul.f32 %v202, %v952
        %v964 = vmul.f32 %v203, %v952
        %v965 = vmul.f32 %v204, %v952
        %v966 = vmul.f32 %v205, %v952
        %v967 = vmul.f32 %v206, %v952
        %v968 = vmul.f32 %v207, %v952
        %v969 = vmul.f32 %v208, %v952
        %v970 = vmul.f32 %v209, %v952
        %v971 = vmul.f32 %v210, %v952
        %v972 = vmul.f32 %v211, %v952
        %v973 = vmul.f32 %v212, %v952
        %v974 = vmul.f32 %v213, %v952
        %v975 = vmul.f32 %v214, %v952
        %v976 = vmul.f32 %v215, %v952
        %v1001 = vrot.slane %v953, 2
        %v1002 = vrot.slane %v954, 2
        %v1003 = vsel %vm432, %v1001, %v1002
        %v1004 = vrot.slane %v955, 2
        %v1005 = vsel %vm432, %v1002, %v1004
        %v1006 = vrot.slane %v956, 2
        %v1007 = vrot.slane %v957, 2
        %v1008 = vsel %vm432, %v1006, %v1007
        %v1009 = vrot.slane %v958, 2
        %v1010 = vsel %vm432, %v1007, %v1009
        %v1011 = vrot.slane %v959, 2
        %v1012 = vrot.slane %v960, 2
        %v1013 = vsel %vm432, %v1011, %v1012
        %v1014 = vrot.slane %v961, 2
        %v1015 = vsel %vm432, %v1012, %v1014
        %v1016 = vrot.slane %v962, 2
        %v1017 = vrot.slane %v963, 2
        %v1018 = vsel %vm432, %v1016, %v1017
        %v1019 = vrot.slane %v964, 2
        %v1020 = vsel %vm432, %v1017, %v1019
        %v1021 = vrot.slane %v965, 2
        %v1022 = vrot.slane %v966, 2
        %v1023 = vsel %vm432, %v1021, %v1022
        %v1024 = vrot.slane %v967, 2
        %v1025 = vsel %vm432, %v1022, %v1024
        %v1026 = vrot.slane %v968, 2
        %v1027 = vrot.slane %v969, 2
        %v1028 = vsel %vm432, %v1026, %v1027
        %v1029 = vrot.slane %v970, 2
        %v1030 = vsel %vm432, %v1027, %v1029
        %v1031 = vrot.slane %v971, 2
        %v1032 = vrot.slane %v972, 2
        %v1033 = vsel %vm432, %v1031, %v1032
        %v1034 = vrot.slane %v973, 2
        %v1035 = vsel %vm432, %v1032, %v1034
        %v1036 = vrot.slane %v974, 2
        %v1037 = vrot.slane %v975, 2
        %v1038 = vsel %vm432, %v1036, %v1037
        %v1039 = vrot.slane %v976, 2
        %v1040 = vsel %vm432, %v1037, %v1039
        %v1057 = vadd.f32 %v933, %v1003
        %v1058 = vadd.f32 %v934, %v1005
        %v1059 = vadd.f32 %v935, %v1008
        %v1060 = vadd.f32 %v936, %v1010
        %v1061 = vadd.f32 %v937, %v1013
        %v1062 = vadd.f32 %v938, %v1015
        %v1063 = vadd.f32 %v939, %v1018
        %v1064 = vadd.f32 %v940, %v1020
        %v1065 = vadd.f32 %v941, %v1023
        %v1066 = vadd.f32 %v942, %v1025
        %v1067 = vadd.f32 %v943, %v1028
        %v1068 = vadd.f32 %v944, %v1030
        %v1069 = vadd.f32 %v945, %v1033
        %v1070 = vadd.f32 %v946, %v1035
        %v1071 = vadd.f32 %v947, %v1038
        %v1072 = vadd.f32 %v948, %v1040
        %v1073 = vld [vmem:[%s2] sm:$0xff]
        %vm1074 = vcmask 31744
        %v1076 = vsel %vm1074, %v1073, 0
        %v1079 = vsel %vm1074, %v1057, 0
        %v1082 = vsel %vm1074, %v1058, 0
        %v1085 = vsel %vm1074, %v1059, 0
        %v1088 = vsel %vm1074, %v1060, 0
        %v1091 = vsel %vm1074, %v1061, 0
        %v1094 = vsel %vm1074, %v1062, 0
        %v1097 = vsel %vm1074, %v1063, 0
        %v1100 = vsel %vm1074, %v1064, 0
        %v1103 = vsel %vm1074, %v1065, 0
        %v1106 = vsel %vm1074, %v1066, 0
        %v1109 = vsel %vm1074, %v1067, 0
        %v1112 = vsel %vm1074, %v1068, 0
        %v1115 = vsel %vm1074, %v1069, 0
        %v1118 = vsel %vm1074, %v1070, 0
        %v1121 = vsel %vm1074, %v1071, 0
        %v1124 = vsel %vm1074, %v1072, 0
        %1126 = vmatprep.subr.mxu0 0.0
        %1127 = vmatpush1.xpose.msra.mxu0 %v1079
        %1128 = vmatprep.subr.mxu0 0.0
        %1129 = vmatpush1.xpose.msra.mxu0 %v1082
        %1130 = vmatprep.subr.mxu0 0.0
        %1131 = vmatpush1.xpose.msra.mxu0 %v1085
        %1132 = vmatprep.subr.mxu0 0.0
        %1133 = vmatpush1.xpose.msra.mxu0 %v1088
        %1134 = vmatprep.subr.mxu0 0.0
        %1135 = vmatpush1.xpose.msra.mxu0 %v1091
        %1136 = vmatprep.subr.mxu0 0.0
        %1137 = vmatpush1.xpose.msra.mxu0 %v1094
        %1138 = vmatprep.subr.mxu0 0.0
        %1139 = vmatpush1.xpose.msra.mxu0 %v1097
        %1140 = vmatprep.subr.mxu0 0.0
        %1141 = vmatpush1.xpose.msra.mxu0 %v1100
        %1142 = vmatprep.subr.mxu0 0.0
        %1143 = vmatpush1.xpose.msra.mxu0 %v1103
        %1144 = vmatprep.subr.mxu0 0.0
        %1145 = vmatpush1.xpose.msra.mxu0 %v1106
        %1146 = vmatprep.subr.mxu0 0.0
        %1147 = vmatpush1.xpose.msra.mxu0 %v1109
        %1148 = vmatprep.subr.mxu0 0.0
        %1149 = vmatpush1.xpose.msra.mxu0 %v1112
        %1150 = vmatprep.subr.mxu0 0.0
        %1151 = vmatpush1.xpose.msra.mxu0 %v1115
        %1152 = vmatprep.subr.mxu0 0.0
        %1153 = vmatpush1.xpose.msra.mxu0 %v1118
        %1154 = vmatprep.subr.mxu0 0.0
        %1155 = vmatpush1.xpose.msra.mxu0 %v1121
        %1156 = vmatprep.subr.mxu0 0.0
        %1157 = vmatpush1.xpose.msra.mxu0 %v1124
        %1158 = vmatprep.subr.mxu0 0.0
        %1159 = vmatpush1.xpose.msra.mxu0 0.0
        %1160 = vmatprep.subr.mxu0 0.0
        %1161 = vmatpush1.xpose.msra.mxu0 0.0
        %1162 = vmatprep.subr.mxu0 0.0
        %1163 = vmatpush1.xpose.msra.mxu0 0.0
        %1164 = vmatprep.subr.mxu0 0.0
        %1165 = vmatpush1.xpose.msra.mxu0 0.0
        %1166 = vmatprep.subr.mxu0 0.0
        %1167 = vmatpush1.xpose.msra.mxu0 0.0
        %1168 = vmatprep.subr.mxu0 0.0
        %1169 = vmatpush1.xpose.msra.mxu0 0.0
        %1170 = vmatprep.subr.mxu0 0.0
        %1171 = vmatpush1.xpose.msra.mxu0 0.0
        %1172 = vmatprep.subr.mxu0 0.0
        %1173 = vmatpush1.xpose.msra.mxu0 0.0
        %1174 = vmatprep.subr.mxu0 0.0
        %1175 = vmatpush1.xpose.msra.mxu0 0.0
        %1176 = vmatprep.subr.mxu0 0.0
        %1177 = vmatpush1.xpose.msra.mxu0 0.0
        %1178 = vmatprep.subr.mxu0 0.0
        %1179 = vmatpush1.xpose.msra.mxu0 0.0
        %1180 = vmatprep.subr.mxu0 0.0
        %1181 = vmatpush1.xpose.msra.mxu0 0.0
        %1182 = vmatprep.subr.mxu0 0.0
        %1183 = vmatpush1.xpose.msra.mxu0 0.0
        %1184 = vmatprep.subr.mxu0 0.0
        %1185 = vmatpush1.xpose.msra.mxu0 0.0
        %1186 = vmatprep.subr.mxu0 0.0
        %1187 = vmatpush1.xpose.msra.mxu0 0.0
        %1188 = vmatprep.subr.mxu0 0.0
        %1189 = vmatpush1.xpose.msra.mxu0 0.0
        %1190 = vmatprep.mubr.f32.mxu0 0.0
        %1191 = vmatmul.mubr.f32.gmra.mrb[0].mxu0 %v1076
        %v1192 = vpop.f32.mrb[0].mxu0
        %v1193 = vadd.f32 0.0, %v1192
        %v1194 = vpop.f32.mrb[0].mxu0
        %1195 = vdwg.mxu0
        %1196 = vst [vmem:[%s177] sm:$0xff] %v1193
        %s1197 = sand.u32 %s107, 1
        %s1198 = scalar_lea.sflag [#allocation3], %s1197
        %s1199 = sand.u32 %s107, 1
        %s1200 = smul.addr %s1199, 8
        %s1201 = scalar_lea.vmem [#allocation2], %s1200
        // Predicated region
        $region33: #{tpu_custom_call.1} parent=31 // pred_check
          %p1202 = pneg %p117
        $region34: #{tpu_custom_call.1} parent=31 // pred_check_branch
          %1204 = sbr.rel (%p1202) target = $region36
        $region35: #{tpu_custom_call.1} parent=31 // pred_region
          %s1206 = ssub.s32 128, 128
          %1207 = vsyncadd %s1198, %s1206
          %s1208 = smul.addr %s21, 2
          %s1209 = sadd.s32 %s22, %s1208
          %s1210 = smul.addr %s1209, 128
          %s1211 = scalar_lea.hbm %s3, %s1210
          %s1213 = sshll.u32 %s1201, 4
          %s1214 = int_to_ptr.vmem [resolvable:$true] %s1213
          %1216 = dma.vmem_to_hbm [thread:$0]  %s1214, 128, %s1211, %s1198
        $region36: #{tpu_custom_call.1} parent=31 // pred_fallthru
          _
      $region32: #{tpu_custom_call.1} parent=5 // pred_fallthru
        _
      %p1217 = scmp.le.s32.totalorder 2, %s12
      // Predicated region
      $region37: #{tpu_custom_call.1} parent=5 // pred_check
        %p1218 = pneg %p1217
      $region38: #{tpu_custom_call.1} parent=5 // pred_check_branch
        %1220 = sbr.rel (%p1218) target = $region40
      $region39: #{tpu_custom_call.1} parent=5 // pred_region
        %s1221 = ssub.s32 %s12, 2
        // Predicated region
        $region41: #{tpu_custom_call.1} parent=39 // pred_check
          %p1222 = pneg %p123
        $region42: #{tpu_custom_call.1} parent=39 // pred_check_branch
          %1224 = sbr.rel (%p1222) target = $region44
        $region43: #{tpu_custom_call.1} parent=39 // pred_region
          %s1225 = sand.u32 %s108, 1
          %s1226 = scalar_lea.sflag [#allocation3], %s1225
          %s1227 = sand.u32 %s108, 1
          %s1228 = smul.addr %s1227, 8
          %s1229 = scalar_lea.vmem [#allocation2], %s1228
          %1230 = dma.done %s1226, 128
        $region44: #{tpu_custom_call.1} parent=39 // pred_fallthru
          _
      $region40: #{tpu_custom_call.1} parent=5 // pred_fallthru
        _
    $region6: #{tpu_custom_call.1} parent=1 // loop_footer
      %s16 = sadd.s32 1, %s12
    $region7: #{tpu_custom_call.1} parent=1 // loop_footer_branch
      %11 = sbr.rel target = $region3
    $region8: #{tpu_custom_call.1} parent=1 // loop_exit
      _
    %1231 = vsyncpa [#allocation3], 1
    %s1232 = scalar_lea.sflag [#allocation3], 1
    %1233 = vsyncpa %s1232, 1

</llo_original>
